<compile_context>
chip_gen: v5e
topology: v5e:2x2
jax: 0.10.0
libtpu: 0.0.40
codegen_flags: <defaults>
</compile_context>

<pallas_src>
import functools

import jax
import jax.numpy as jnp
from jax.experimental import pallas as pl
from jax.experimental.pallas import tpu as pltpu


def _dilated_circ_conv_kernel(x_ref, w_ref, b_ref, o_ref, *,
                              ksize, dilation, n_adj, batch_tile, seq_len):
    """One batch group (TB elements) per grid step.

    x_ref: (TB, C_in, N)     unpadded inputs (N in lanes)
    w_ref: (C_out, K*C_in)   weights flattened tap-major (row = k*C_in + ci)
    b_ref: (C_out, 1)        bias (broadcasts over lanes)
    o_ref: (TB, C_out, N)    outputs
    """
    n = seq_len
    x = x_ref[...]                                   # (TB, C_in, N)
    lane_aligned = (n % 128 == 0)

    def circ_shift(a, shift):
        # a: (C_in, N); circular shift toward higher indices (jnp.roll
        # semantics): out[..., i] = a[..., (i - shift) mod N].
        if shift == 0:
            return a
        if lane_aligned:
            return pltpu.roll(a, shift=shift, axis=1)   # XLU lane rotate
        # Fallback when N is not a lane multiple: two static lane slices.
        return jnp.concatenate([a[:, n - shift:], a[:, :n - shift]], axis=1)

    # im2col slab (K*C_in, TB*N): rows tap-major / channel-minor (matches w_ref
    # flattening), columns batch-major / position-minor.
    slabs = []
    for b in range(batch_tile):
        xb = x[b]                                    # (C_in, N)  static index
        parts = [circ_shift(xb, ((n_adj - k) * dilation) % n)
                 for k in range(ksize)]
        slabs.append(jnp.concatenate(parts, axis=0))  # (K*C_in, N)
    col = slabs[0] if batch_tile == 1 else jnp.concatenate(slabs, axis=1)

    # Single fused MXU matmul, f32 accumulation, lane-dense (C_out, TB*N).
    acc = jnp.dot(w_ref[...], col, preferred_element_type=jnp.float32)
    acc = acc + b_ref[...]

    for b in range(batch_tile):
        o_ref[b] = acc[:, b * n:(b + 1) * n].astype(o_ref.dtype)


def _auto_batch_tile(batch):
    # Keep >= 2 grid steps when possible (v7x shards the parallel batch axis
    # over its 2 TensorCores); cap at 8 to keep per-step blocks small.
    if batch <= 1:
        return 1
    return max(1, min(8, batch // 2))


def dilated_circ_conv(x_ncl, weight, bias, *, n_adj=4, dilation=1,
                      batch_tile=None):
    """x_ncl:  (B, C_in, N)    PyTorch NCL layout (kept end-to-end, no transposes).
    weight: (C_out, C_in, K)  PyTorch Conv1d layout, K = 2*n_adj + 1.
    bias:   (C_out,)
    Returns (B, C_out, N)."""
    B, C_in, N = x_ncl.shape
    C_out, C_in_w, K = weight.shape
    assert C_in_w == C_in and K == 2 * n_adj + 1

    pad = n_adj * dilation
    # TODO(synk): torch silently under-pads when n_adj*dilation > N; that edge
    # case is not reproduced here.
    assert pad <= N, "n_adj * dilation must be <= sequence length"

    tb = _auto_batch_tile(B) if batch_tile is None else batch_tile
    n_groups = pl.cdiv(B, tb)
    b_pad = n_groups * tb
    x_in = x_ncl
    if b_pad != B:
        x_in = jnp.concatenate(
            [x_ncl, jnp.zeros((b_pad - B, C_in, N), x_ncl.dtype)], axis=0)

    # Flatten weights once in the wrapper to (C_out, K*C_in), rows k-major /
    # ci-minor, matching the in-kernel im2col slab.
    w2 = jnp.transpose(weight, (0, 2, 1)).reshape(C_out, K * C_in)
    b2 = bias.reshape(C_out, 1)

    kernel = functools.partial(
        _dilated_circ_conv_kernel, ksize=K, dilation=dilation, n_adj=n_adj,
        batch_tile=tb, seq_len=N)

    out = pl.pallas_call(
        kernel,
        out_shape=jax.ShapeDtypeStruct((b_pad, C_out, N), x_ncl.dtype),
        grid_spec=pltpu.PrefetchScalarGridSpec(
            num_scalar_prefetch=0,
            grid=(n_groups,),
            in_specs=[
                pl.BlockSpec((tb, C_in, N), lambda g: (g, 0, 0)),
                pl.BlockSpec((C_out, K * C_in), lambda g: (0, 0)),  # VMEM-resident
                pl.BlockSpec((C_out, 1), lambda g: (0, 0)),         # VMEM-resident
            ],
            out_specs=pl.BlockSpec((tb, C_out, N), lambda g: (g, 0, 0)),
        ),
        compiler_params=pltpu.CompilerParams(
            dimension_semantics=("parallel",)),
    )(x_in, w2, b2)
    return out[:B] if b_pad != B else out


def _reference(x_ncl, weight, bias, *, n_adj, dilation):
    """Pure-JAX reference matching torch.nn.Conv1d on the circular-padded input."""
    pad = n_adj * dilation
    if n_adj != 0:
        x_ncl = jnp.concatenate(
            [x_ncl[..., -pad:], x_ncl, x_ncl[..., :pad]], axis=2)
    out = jax.lax.conv_general_dilated(
        x_ncl, weight,
        window_strides=(1,), padding="VALID",
        rhs_dilation=(dilation,),
        dimension_numbers=("NCH", "OIH", "NCH"),
    )
    return out + bias.reshape(1, -1, 1)


def _run_case(key, B, C_in, C_out, N, n_adj, dilation, batch_tile=None):
    K = 2 * n_adj + 1
    kx, kw, kb = jax.random.split(key, 3)
    x = jax.random.normal(kx, (B, C_in, N), dtype=jnp.float32)
    weight = 0.1 * jax.random.normal(kw, (C_out, C_in, K), dtype=jnp.float32)
    bias = 0.1 * jax.random.normal(kb, (C_out,), dtype=jnp.float32)

    out = dilated_circ_conv(x, weight, bias, n_adj=n_adj, dilation=dilation,
                            batch_tile=batch_tile)
    out = jax.block_until_ready(out)

    ref = _reference(x, weight, bias, n_adj=n_adj, dilation=dilation)
    assert out.shape == (B, C_out, N)
    assert jnp.allclose(out, ref, atol=1e-3, rtol=1e-3)


if __name__ == "__main__":
    # Module defaults: state_dim=4, out_state_dim=4, n_adj=4, dilation=1
    # -> Conv1d(4, 4, kernel_size=9, dilation=1); N=128 contour points (typical).
    key = jax.random.PRNGKey(0)
    k1, k2, k3 = jax.random.split(key, 3)

    # Batched path: TB auto = 8, grid = 2 (>=2 parallel steps), 1024-lane matmul RHS.
    _run_case(k1, B=16, C_in=4, C_out=4, N=128, n_adj=4, dilation=1)
    # Minimal batch at module defaults: TB = 1, grid = 2.
    _run_case(k2, B=2, C_in=4, C_out=4, N=128, n_adj=4, dilation=1)
    # Dilation > 1, non-128 sequence (fallback slice path), odd B with explicit
    # batch_tile to exercise batch padding.
    _run_case(k3, B=5, C_in=4, C_out=8, N=40, n_adj=2, dilation=2, batch_tile=2)

    print("KERNEL_OK")
</pallas_src>

<mosaic_0001>
module attributes {stable_mosaic.version = 11 : i64} {
  func.func @_dilated_circ_conv_kernel(%arg0: i32, %arg1: memref<8x4x128xf32, #tpu.memory_space<vmem>>, %arg2: memref<4x36xf32, #tpu.memory_space<vmem>>, %arg3: memref<4x1xf32, #tpu.memory_space<vmem>>, %arg4: memref<8x4x128xf32, #tpu.memory_space<vmem>>) attributes {dimension_semantics = [#tpu.dimension_semantics<parallel>], iteration_bounds = array<i64: 2>, scalar_prefetch = 0 : i64, scratch_operands = 0 : i64, tpu.core_type = #tpu.core_type<tc>, window_params = [{transform_indices = @transform_0, window_bounds = array<i64: 8, 4, 128>}, {pipeline_mode = #tpu.pipeline_mode<synchronous>, transform_indices = @transform_1, window_bounds = array<i64: 4, 36>}, {pipeline_mode = #tpu.pipeline_mode<synchronous>, transform_indices = @transform_2, window_bounds = array<i64: 4, 1>}, {transform_indices = @transform_3, window_bounds = array<i64: 8, 4, 128>}]} {
    %c0 = arith.constant 0 : index
    %c0_0 = arith.constant 0 : index
    %c0_1 = arith.constant 0 : index
    %0 = vector.load %arg1[%c0, %c0_0, %c0_1] : memref<8x4x128xf32, #tpu.memory_space<vmem>>, vector<8x4x128xf32>
    %1 = vector.extract_strided_slice %0 {offsets = [0, 0, 0], sizes = [1, 4, 128], strides = [1, 1, 1]} : vector<8x4x128xf32> to vector<1x4x128xf32>
    %2 = vector.shape_cast %1 : vector<1x4x128xf32> to vector<4x128xf32>
    %c4_i32 = arith.constant 4 : i32
    %3 = tpu.dynamic_rotate %2 by %c4_i32 dim 1 : vector<4x128xf32>, i32 -> vector<4x128xf32>
    %c3_i32 = arith.constant 3 : i32
    %4 = tpu.dynamic_rotate %2 by %c3_i32 dim 1 : vector<4x128xf32>, i32 -> vector<4x128xf32>
    %c2_i32 = arith.constant 2 : i32
    %5 = tpu.dynamic_rotate %2 by %c2_i32 dim 1 : vector<4x128xf32>, i32 -> vector<4x128xf32>
    %c1_i32 = arith.constant 1 : i32
    %6 = tpu.dynamic_rotate %2 by %c1_i32 dim 1 : vector<4x128xf32>, i32 -> vector<4x128xf32>
    %c127_i32 = arith.constant 127 : i32
    %7 = tpu.dynamic_rotate %2 by %c127_i32 dim 1 : vector<4x128xf32>, i32 -> vector<4x128xf32>
    %c126_i32 = arith.constant 126 : i32
    %8 = tpu.dynamic_rotate %2 by %c126_i32 dim 1 : vector<4x128xf32>, i32 -> vector<4x128xf32>
    %c125_i32 = arith.constant 125 : i32
    %9 = tpu.dynamic_rotate %2 by %c125_i32 dim 1 : vector<4x128xf32>, i32 -> vector<4x128xf32>
    %c124_i32 = arith.constant 124 : i32
    %10 = tpu.dynamic_rotate %2 by %c124_i32 dim 1 : vector<4x128xf32>, i32 -> vector<4x128xf32>
    %11 = tpu.concatenate %3, %4, %5, %6, %2, %7, %8, %9, %10 in 0 : vector<4x128xf32>, vector<4x128xf32>, vector<4x128xf32>, vector<4x128xf32>, vector<4x128xf32>, vector<4x128xf32>, vector<4x128xf32>, vector<4x128xf32>, vector<4x128xf32> -> vector<36x128xf32>
    %12 = vector.extract_strided_slice %0 {offsets = [1, 0, 0], sizes = [1, 4, 128], strides = [1, 1, 1]} : vector<8x4x128xf32> to vector<1x4x128xf32>
    %13 = vector.shape_cast %12 : vector<1x4x128xf32> to vector<4x128xf32>
    %c4_i32_2 = arith.constant 4 : i32
    %14 = tpu.dynamic_rotate %13 by %c4_i32_2 dim 1 : vector<4x128xf32>, i32 -> vector<4x128xf32>
    %c3_i32_3 = arith.constant 3 : i32
    %15 = tpu.dynamic_rotate %13 by %c3_i32_3 dim 1 : vector<4x128xf32>, i32 -> vector<4x128xf32>
    %c2_i32_4 = arith.constant 2 : i32
    %16 = tpu.dynamic_rotate %13 by %c2_i32_4 dim 1 : vector<4x128xf32>, i32 -> vector<4x128xf32>
    %c1_i32_5 = arith.constant 1 : i32
    %17 = tpu.dynamic_rotate %13 by %c1_i32_5 dim 1 : vector<4x128xf32>, i32 -> vector<4x128xf32>
    %c127_i32_6 = arith.constant 127 : i32
    %18 = tpu.dynamic_rotate %13 by %c127_i32_6 dim 1 : vector<4x128xf32>, i32 -> vector<4x128xf32>
    %c126_i32_7 = arith.constant 126 : i32
    %19 = tpu.dynamic_rotate %13 by %c126_i32_7 dim 1 : vector<4x128xf32>, i32 -> vector<4x128xf32>
    %c125_i32_8 = arith.constant 125 : i32
    %20 = tpu.dynamic_rotate %13 by %c125_i32_8 dim 1 : vector<4x128xf32>, i32 -> vector<4x128xf32>
    %c124_i32_9 = arith.constant 124 : i32
    %21 = tpu.dynamic_rotate %13 by %c124_i32_9 dim 1 : vector<4x128xf32>, i32 -> vector<4x128xf32>
    %22 = tpu.concatenate %14, %15, %16, %17, %13, %18, %19, %20, %21 in 0 : vector<4x128xf32>, vector<4x128xf32>, vector<4x128xf32>, vector<4x128xf32>, vector<4x128xf32>, vector<4x128xf32>, vector<4x128xf32>, vector<4x128xf32>, vector<4x128xf32> -> vector<36x128xf32>
    %23 = vector.extract_strided_slice %0 {offsets = [2, 0, 0], sizes = [1, 4, 128], strides = [1, 1, 1]} : vector<8x4x128xf32> to vector<1x4x128xf32>
    %24 = vector.shape_cast %23 : vector<1x4x128xf32> to vector<4x128xf32>
    %c4_i32_10 = arith.constant 4 : i32
    %25 = tpu.dynamic_rotate %24 by %c4_i32_10 dim 1 : vector<4x128xf32>, i32 -> vector<4x128xf32>
    %c3_i32_11 = arith.constant 3 : i32
    %26 = tpu.dynamic_rotate %24 by %c3_i32_11 dim 1 : vector<4x128xf32>, i32 -> vector<4x128xf32>
    %c2_i32_12 = arith.constant 2 : i32
    %27 = tpu.dynamic_rotate %24 by %c2_i32_12 dim 1 : vector<4x128xf32>, i32 -> vector<4x128xf32>
    %c1_i32_13 = arith.constant 1 : i32
    %28 = tpu.dynamic_rotate %24 by %c1_i32_13 dim 1 : vector<4x128xf32>, i32 -> vector<4x128xf32>
    %c127_i32_14 = arith.constant 127 : i32
    %29 = tpu.dynamic_rotate %24 by %c127_i32_14 dim 1 : vector<4x128xf32>, i32 -> vector<4x128xf32>
    %c126_i32_15 = arith.constant 126 : i32
    %30 = tpu.dynamic_rotate %24 by %c126_i32_15 dim 1 : vector<4x128xf32>, i32 -> vector<4x128xf32>
    %c125_i32_16 = arith.constant 125 : i32
    %31 = tpu.dynamic_rotate %24 by %c125_i32_16 dim 1 : vector<4x128xf32>, i32 -> vector<4x128xf32>
    %c124_i32_17 = arith.constant 124 : i32
    %32 = tpu.dynamic_rotate %24 by %c124_i32_17 dim 1 : vector<4x128xf32>, i32 -> vector<4x128xf32>
    %33 = tpu.concatenate %25, %26, %27, %28, %24, %29, %30, %31, %32 in 0 : vector<4x128xf32>, vector<4x128xf32>, vector<4x128xf32>, vector<4x128xf32>, vector<4x128xf32>, vector<4x128xf32>, vector<4x128xf32>, vector<4x128xf32>, vector<4x128xf32> -> vector<36x128xf32>
    %34 = vector.extract_strided_slice %0 {offsets = [3, 0, 0], sizes = [1, 4, 128], strides = [1, 1, 1]} : vector<8x4x128xf32> to vector<1x4x128xf32>
    %35 = vector.shape_cast %34 : vector<1x4x128xf32> to vector<4x128xf32>
    %c4_i32_18 = arith.constant 4 : i32
    %36 = tpu.dynamic_rotate %35 by %c4_i32_18 dim 1 : vector<4x128xf32>, i32 -> vector<4x128xf32>
    %c3_i32_19 = arith.constant 3 : i32
    %37 = tpu.dynamic_rotate %35 by %c3_i32_19 dim 1 : vector<4x128xf32>, i32 -> vector<4x128xf32>
    %c2_i32_20 = arith.constant 2 : i32
    %38 = tpu.dynamic_rotate %35 by %c2_i32_20 dim 1 : vector<4x128xf32>, i32 -> vector<4x128xf32>
    %c1_i32_21 = arith.constant 1 : i32
    %39 = tpu.dynamic_rotate %35 by %c1_i32_21 dim 1 : vector<4x128xf32>, i32 -> vector<4x128xf32>
    %c127_i32_22 = arith.constant 127 : i32
    %40 = tpu.dynamic_rotate %35 by %c127_i32_22 dim 1 : vector<4x128xf32>, i32 -> vector<4x128xf32>
    %c126_i32_23 = arith.constant 126 : i32
    %41 = tpu.dynamic_rotate %35 by %c126_i32_23 dim 1 : vector<4x128xf32>, i32 -> vector<4x128xf32>
    %c125_i32_24 = arith.constant 125 : i32
    %42 = tpu.dynamic_rotate %35 by %c125_i32_24 dim 1 : vector<4x128xf32>, i32 -> vector<4x128xf32>
    %c124_i32_25 = arith.constant 124 : i32
    %43 = tpu.dynamic_rotate %35 by %c124_i32_25 dim 1 : vector<4x128xf32>, i32 -> vector<4x128xf32>
    %44 = tpu.concatenate %36, %37, %38, %39, %35, %40, %41, %42, %43 in 0 : vector<4x128xf32>, vector<4x128xf32>, vector<4x128xf32>, vector<4x128xf32>, vector<4x128xf32>, vector<4x128xf32>, vector<4x128xf32>, vector<4x128xf32>, vector<4x128xf32> -> vector<36x128xf32>
    %45 = vector.extract_strided_slice %0 {offsets = [4, 0, 0], sizes = [1, 4, 128], strides = [1, 1, 1]} : vector<8x4x128xf32> to vector<1x4x128xf32>
    %46 = vector.shape_cast %45 : vector<1x4x128xf32> to vector<4x128xf32>
    %c4_i32_26 = arith.constant 4 : i32
    %47 = tpu.dynamic_rotate %46 by %c4_i32_26 dim 1 : vector<4x128xf32>, i32 -> vector<4x128xf32>
    %c3_i32_27 = arith.constant 3 : i32
    %48 = tpu.dynamic_rotate %46 by %c3_i32_27 dim 1 : vector<4x128xf32>, i32 -> vector<4x128xf32>
    %c2_i32_28 = arith.constant 2 : i32
    %49 = tpu.dynamic_rotate %46 by %c2_i32_28 dim 1 : vector<4x128xf32>, i32 -> vector<4x128xf32>
    %c1_i32_29 = arith.constant 1 : i32
    %50 = tpu.dynamic_rotate %46 by %c1_i32_29 dim 1 : vector<4x128xf32>, i32 -> vector<4x128xf32>
    %c127_i32_30 = arith.constant 127 : i32
    %51 = tpu.dynamic_rotate %46 by %c127_i32_30 dim 1 : vector<4x128xf32>, i32 -> vector<4x128xf32>
    %c126_i32_31 = arith.constant 126 : i32
    %52 = tpu.dynamic_rotate %46 by %c126_i32_31 dim 1 : vector<4x128xf32>, i32 -> vector<4x128xf32>
    %c125_i32_32 = arith.constant 125 : i32
    %53 = tpu.dynamic_rotate %46 by %c125_i32_32 dim 1 : vector<4x128xf32>, i32 -> vector<4x128xf32>
    %c124_i32_33 = arith.constant 124 : i32
    %54 = tpu.dynamic_rotate %46 by %c124_i32_33 dim 1 : vector<4x128xf32>, i32 -> vector<4x128xf32>
    %55 = tpu.concatenate %47, %48, %49, %50, %46, %51, %52, %53, %54 in 0 : vector<4x128xf32>, vector<4x128xf32>, vector<4x128xf32>, vector<4x128xf32>, vector<4x128xf32>, vector<4x128xf32>, vector<4x128xf32>, vector<4x128xf32>, vector<4x128xf32> -> vector<36x128xf32>
    %56 = vector.extract_strided_slice %0 {offsets = [5, 0, 0], sizes = [1, 4, 128], strides = [1, 1, 1]} : vector<8x4x128xf32> to vector<1x4x128xf32>
    %57 = vector.shape_cast %56 : vector<1x4x128xf32> to vector<4x128xf32>
    %c4_i32_34 = arith.constant 4 : i32
    %58 = tpu.dynamic_rotate %57 by %c4_i32_34 dim 1 : vector<4x128xf32>, i32 -> vector<4x128xf32>
    %c3_i32_35 = arith.constant 3 : i32
    %59 = tpu.dynamic_rotate %57 by %c3_i32_35 dim 1 : vector<4x128xf32>, i32 -> vector<4x128xf32>
    %c2_i32_36 = arith.constant 2 : i32
    %60 = tpu.dynamic_rotate %57 by %c2_i32_36 dim 1 : vector<4x128xf32>, i32 -> vector<4x128xf32>
    %c1_i32_37 = arith.constant 1 : i32
    %61 = tpu.dynamic_rotate %57 by %c1_i32_37 dim 1 : vector<4x128xf32>, i32 -> vector<4x128xf32>
    %c127_i32_38 = arith.constant 127 : i32
    %62 = tpu.dynamic_rotate %57 by %c127_i32_38 dim 1 : vector<4x128xf32>, i32 -> vector<4x128xf32>
    %c126_i32_39 = arith.constant 126 : i32
    %63 = tpu.dynamic_rotate %57 by %c126_i32_39 dim 1 : vector<4x128xf32>, i32 -> vector<4x128xf32>
    %c125_i32_40 = arith.constant 125 : i32
    %64 = tpu.dynamic_rotate %57 by %c125_i32_40 dim 1 : vector<4x128xf32>, i32 -> vector<4x128xf32>
    %c124_i32_41 = arith.constant 124 : i32
    %65 = tpu.dynamic_rotate %57 by %c124_i32_41 dim 1 : vector<4x128xf32>, i32 -> vector<4x128xf32>
    %66 = tpu.concatenate %58, %59, %60, %61, %57, %62, %63, %64, %65 in 0 : vector<4x128xf32>, vector<4x128xf32>, vector<4x128xf32>, vector<4x128xf32>, vector<4x128xf32>, vector<4x128xf32>, vector<4x128xf32>, vector<4x128xf32>, vector<4x128xf32> -> vector<36x128xf32>
    %67 = vector.extract_strided_slice %0 {offsets = [6, 0, 0], sizes = [1, 4, 128], strides = [1, 1, 1]} : vector<8x4x128xf32> to vector<1x4x128xf32>
    %68 = vector.shape_cast %67 : vector<1x4x128xf32> to vector<4x128xf32>
    %c4_i32_42 = arith.constant 4 : i32
    %69 = tpu.dynamic_rotate %68 by %c4_i32_42 dim 1 : vector<4x128xf32>, i32 -> vector<4x128xf32>
    %c3_i32_43 = arith.constant 3 : i32
    %70 = tpu.dynamic_rotate %68 by %c3_i32_43 dim 1 : vector<4x128xf32>, i32 -> vector<4x128xf32>
    %c2_i32_44 = arith.constant 2 : i32
    %71 = tpu.dynamic_rotate %68 by %c2_i32_44 dim 1 : vector<4x128xf32>, i32 -> vector<4x128xf32>
    %c1_i32_45 = arith.constant 1 : i32
    %72 = tpu.dynamic_rotate %68 by %c1_i32_45 dim 1 : vector<4x128xf32>, i32 -> vector<4x128xf32>
    %c127_i32_46 = arith.constant 127 : i32
    %73 = tpu.dynamic_rotate %68 by %c127_i32_46 dim 1 : vector<4x128xf32>, i32 -> vector<4x128xf32>
    %c126_i32_47 = arith.constant 126 : i32
    %74 = tpu.dynamic_rotate %68 by %c126_i32_47 dim 1 : vector<4x128xf32>, i32 -> vector<4x128xf32>
    %c125_i32_48 = arith.constant 125 : i32
    %75 = tpu.dynamic_rotate %68 by %c125_i32_48 dim 1 : vector<4x128xf32>, i32 -> vector<4x128xf32>
    %c124_i32_49 = arith.constant 124 : i32
    %76 = tpu.dynamic_rotate %68 by %c124_i32_49 dim 1 : vector<4x128xf32>, i32 -> vector<4x128xf32>
    %77 = tpu.concatenate %69, %70, %71, %72, %68, %73, %74, %75, %76 in 0 : vector<4x128xf32>, vector<4x128xf32>, vector<4x128xf32>, vector<4x128xf32>, vector<4x128xf32>, vector<4x128xf32>, vector<4x128xf32>, vector<4x128xf32>, vector<4x128xf32> -> vector<36x128xf32>
    %78 = vector.extract_strided_slice %0 {offsets = [7, 0, 0], sizes = [1, 4, 128], strides = [1, 1, 1]} : vector<8x4x128xf32> to vector<1x4x128xf32>
    %79 = vector.shape_cast %78 : vector<1x4x128xf32> to vector<4x128xf32>
    %c4_i32_50 = arith.constant 4 : i32
    %80 = tpu.dynamic_rotate %79 by %c4_i32_50 dim 1 : vector<4x128xf32>, i32 -> vector<4x128xf32>
    %c3_i32_51 = arith.constant 3 : i32
    %81 = tpu.dynamic_rotate %79 by %c3_i32_51 dim 1 : vector<4x128xf32>, i32 -> vector<4x128xf32>
    %c2_i32_52 = arith.constant 2 : i32
    %82 = tpu.dynamic_rotate %79 by %c2_i32_52 dim 1 : vector<4x128xf32>, i32 -> vector<4x128xf32>
    %c1_i32_53 = arith.constant 1 : i32
    %83 = tpu.dynamic_rotate %79 by %c1_i32_53 dim 1 : vector<4x128xf32>, i32 -> vector<4x128xf32>
    %c127_i32_54 = arith.constant 127 : i32
    %84 = tpu.dynamic_rotate %79 by %c127_i32_54 dim 1 : vector<4x128xf32>, i32 -> vector<4x128xf32>
    %c126_i32_55 = arith.constant 126 : i32
    %85 = tpu.dynamic_rotate %79 by %c126_i32_55 dim 1 : vector<4x128xf32>, i32 -> vector<4x128xf32>
    %c125_i32_56 = arith.constant 125 : i32
    %86 = tpu.dynamic_rotate %79 by %c125_i32_56 dim 1 : vector<4x128xf32>, i32 -> vector<4x128xf32>
    %c124_i32_57 = arith.constant 124 : i32
    %87 = tpu.dynamic_rotate %79 by %c124_i32_57 dim 1 : vector<4x128xf32>, i32 -> vector<4x128xf32>
    %88 = tpu.concatenate %80, %81, %82, %83, %79, %84, %85, %86, %87 in 0 : vector<4x128xf32>, vector<4x128xf32>, vector<4x128xf32>, vector<4x128xf32>, vector<4x128xf32>, vector<4x128xf32>, vector<4x128xf32>, vector<4x128xf32>, vector<4x128xf32> -> vector<36x128xf32>
    %89 = tpu.concatenate %11, %22, %33, %44, %55, %66, %77, %88 in 1 : vector<36x128xf32>, vector<36x128xf32>, vector<36x128xf32>, vector<36x128xf32>, vector<36x128xf32>, vector<36x128xf32>, vector<36x128xf32>, vector<36x128xf32> -> vector<36x1024xf32>
    %c0_58 = arith.constant 0 : index
    %c0_59 = arith.constant 0 : index
    %90 = vector.load %arg2[%c0_58, %c0_59] : memref<4x36xf32, #tpu.memory_space<vmem>>, vector<4x36xf32>
    %cst = arith.constant dense<0.000000e+00> : vector<4x1024xf32>
    %91 = tpu.matmul %90, %89, %cst {dimension_numbers = #tpu.dot_dimension_numbers<[1], [0], [0], [1], [0, 0, 1, 1], [], []>} : vector<4x36xf32>, vector<36x1024xf32>, vector<4x1024xf32> -> vector<4x1024xf32>
    %c0_60 = arith.constant 0 : index
    %c0_61 = arith.constant 0 : index
    %92 = vector.load %arg3[%c0_60, %c0_61] : memref<4x1xf32, #tpu.memory_space<vmem>>, vector<4x1xf32>
    %93 = vector.broadcast %92 : vector<4x1xf32> to vector<4x1024xf32>
    %94 = arith.addf %91, %93 : vector<4x1024xf32>
    %95 = vector.extract_strided_slice %94 {offsets = [0, 0], sizes = [4, 128], strides = [1, 1]} : vector<4x1024xf32> to vector<4x128xf32>
    %c0_62 = arith.constant 0 : index
    %c0_63 = arith.constant 0 : index
    %c0_64 = arith.constant 0 : index
    %96 = vector.load %arg4[%c0_62, %c0_63, %c0_64] : memref<8x4x128xf32, #tpu.memory_space<vmem>>, vector<1x4x128xf32>
    %97 = vector.shape_cast %96 : vector<1x4x128xf32> to vector<4x128xf32>
    %98 = vector.shape_cast %95 : vector<4x128xf32> to vector<1x4x128xf32>
    tpu.vector_store %arg4[%c0_62, %c0_63, %c0_64], %98 {strides = array<i32>} : memref<8x4x128xf32, #tpu.memory_space<vmem>>, vector<1x4x128xf32>,
    %99 = vector.extract_strided_slice %94 {offsets = [0, 128], sizes = [4, 128], strides = [1, 1]} : vector<4x1024xf32> to vector<4x128xf32>
    %c1 = arith.constant 1 : index
    %c0_65 = arith.constant 0 : index
    %c0_66 = arith.constant 0 : index
    %100 = vector.load %arg4[%c1, %c0_65, %c0_66] : memref<8x4x128xf32, #tpu.memory_space<vmem>>, vector<1x4x128xf32>
    %101 = vector.shape_cast %100 : vector<1x4x128xf32> to vector<4x128xf32>
    %102 = vector.shape_cast %99 : vector<4x128xf32> to vector<1x4x128xf32>
    tpu.vector_store %arg4[%c1, %c0_65, %c0_66], %102 {strides = array<i32>} : memref<8x4x128xf32, #tpu.memory_space<vmem>>, vector<1x4x128xf32>,
    %103 = vector.extract_strided_slice %94 {offsets = [0, 256], sizes = [4, 128], strides = [1, 1]} : vector<4x1024xf32> to vector<4x128xf32>
    %c2 = arith.constant 2 : index
    %c0_67 = arith.constant 0 : index
    %c0_68 = arith.constant 0 : index
    %104 = vector.load %arg4[%c2, %c0_67, %c0_68] : memref<8x4x128xf32, #tpu.memory_space<vmem>>, vector<1x4x128xf32>
    %105 = vector.shape_cast %104 : vector<1x4x128xf32> to vector<4x128xf32>
    %106 = vector.shape_cast %103 : vector<4x128xf32> to vector<1x4x128xf32>
    tpu.vector_store %arg4[%c2, %c0_67, %c0_68], %106 {strides = array<i32>} : memref<8x4x128xf32, #tpu.memory_space<vmem>>, vector<1x4x128xf32>,
    %107 = vector.extract_strided_slice %94 {offsets = [0, 384], sizes = [4, 128], strides = [1, 1]} : vector<4x1024xf32> to vector<4x128xf32>
    %c3 = arith.constant 3 : index
    %c0_69 = arith.constant 0 : index
    %c0_70 = arith.constant 0 : index
    %108 = vector.load %arg4[%c3, %c0_69, %c0_70] : memref<8x4x128xf32, #tpu.memory_space<vmem>>, vector<1x4x128xf32>
    %109 = vector.shape_cast %108 : vector<1x4x128xf32> to vector<4x128xf32>
    %110 = vector.shape_cast %107 : vector<4x128xf32> to vector<1x4x128xf32>
    tpu.vector_store %arg4[%c3, %c0_69, %c0_70], %110 {strides = array<i32>} : memref<8x4x128xf32, #tpu.memory_space<vmem>>, vector<1x4x128xf32>,
    %111 = vector.extract_strided_slice %94 {offsets = [0, 512], sizes = [4, 128], strides = [1, 1]} : vector<4x1024xf32> to vector<4x128xf32>
    %c4 = arith.constant 4 : index
    %c0_71 = arith.constant 0 : index
    %c0_72 = arith.constant 0 : index
    %112 = vector.load %arg4[%c4, %c0_71, %c0_72] : memref<8x4x128xf32, #tpu.memory_space<vmem>>, vector<1x4x128xf32>
    %113 = vector.shape_cast %112 : vector<1x4x128xf32> to vector<4x128xf32>
    %114 = vector.shape_cast %111 : vector<4x128xf32> to vector<1x4x128xf32>
    tpu.vector_store %arg4[%c4, %c0_71, %c0_72], %114 {strides = array<i32>} : memref<8x4x128xf32, #tpu.memory_space<vmem>>, vector<1x4x128xf32>,
    %115 = vector.extract_strided_slice %94 {offsets = [0, 640], sizes = [4, 128], strides = [1, 1]} : vector<4x1024xf32> to vector<4x128xf32>
    %c5 = arith.constant 5 : index
    %c0_73 = arith.constant 0 : index
    %c0_74 = arith.constant 0 : index
    %116 = vector.load %arg4[%c5, %c0_73, %c0_74] : memref<8x4x128xf32, #tpu.memory_space<vmem>>, vector<1x4x128xf32>
    %117 = vector.shape_cast %116 : vector<1x4x128xf32> to vector<4x128xf32>
    %118 = vector.shape_cast %115 : vector<4x128xf32> to vector<1x4x128xf32>
    tpu.vector_store %arg4[%c5, %c0_73, %c0_74], %118 {strides = array<i32>} : memref<8x4x128xf32, #tpu.memory_space<vmem>>, vector<1x4x128xf32>,
    %119 = vector.extract_strided_slice %94 {offsets = [0, 768], sizes = [4, 128], strides = [1, 1]} : vector<4x1024xf32> to vector<4x128xf32>
    %c6 = arith.constant 6 : index
    %c0_75 = arith.constant 0 : index
    %c0_76 = arith.constant 0 : index
    %120 = vector.load %arg4[%c6, %c0_75, %c0_76] : memref<8x4x128xf32, #tpu.memory_space<vmem>>, vector<1x4x128xf32>
    %121 = vector.shape_cast %120 : vector<1x4x128xf32> to vector<4x128xf32>
    %122 = vector.shape_cast %119 : vector<4x128xf32> to vector<1x4x128xf32>
    tpu.vector_store %arg4[%c6, %c0_75, %c0_76], %122 {strides = array<i32>} : memref<8x4x128xf32, #tpu.memory_space<vmem>>, vector<1x4x128xf32>,
    %123 = vector.extract_strided_slice %94 {offsets = [0, 896], sizes = [4, 128], strides = [1, 1]} : vector<4x1024xf32> to vector<4x128xf32>
    %c7 = arith.constant 7 : index
    %c0_77 = arith.constant 0 : index
    %c0_78 = arith.constant 0 : index
    %124 = vector.load %arg4[%c7, %c0_77, %c0_78] : memref<8x4x128xf32, #tpu.memory_space<vmem>>, vector<1x4x128xf32>
    %125 = vector.shape_cast %124 : vector<1x4x128xf32> to vector<4x128xf32>
    %126 = vector.shape_cast %123 : vector<4x128xf32> to vector<1x4x128xf32>
    tpu.vector_store %arg4[%c7, %c0_77, %c0_78], %126 {strides = array<i32>} : memref<8x4x128xf32, #tpu.memory_space<vmem>>, vector<1x4x128xf32>,
    return
  }
  func.func @transform_0(%arg0: i32) -> (i32, i32, i32) {
    %c0_i32 = arith.constant 0 : i32
    %c0_i32_0 = arith.constant 0 : i32
    %c0_i32_1 = arith.constant 0 : i32
    return %arg0, %c0_i32, %c0_i32_0 : i32, i32, i32
  }
  func.func @transform_1(%arg0: i32) -> (i32, i32) {
    %c0_i32 = arith.constant 0 : i32
    %c0_i32_0 = arith.constant 0 : i32
    %c0_i32_1 = arith.constant 0 : i32
    return %c0_i32, %c0_i32_0 : i32, i32
  }
  func.func @transform_2(%arg0: i32) -> (i32, i32) {
    %c0_i32 = arith.constant 0 : i32
    %c0_i32_0 = arith.constant 0 : i32
    %c0_i32_1 = arith.constant 0 : i32
    return %c0_i32, %c0_i32_0 : i32, i32
  }
  func.func @transform_3(%arg0: i32) -> (i32, i32, i32) {
    %c0_i32 = arith.constant 0 : i32
    %c0_i32_0 = arith.constant 0 : i32
    %c0_i32_1 = arith.constant 0 : i32
    return %arg0, %c0_i32, %c0_i32_0 : i32, i32, i32
  }
}

</mosaic_0001>

<llo_original>
// kernel: tpu_custom_call.1
$region0: #{tpu_custom_call.1}
  #allocation0 [shape = 'u32[]', space=smem, size = 0x4, offset = 0x4, fixed_abs, tag = 'smem constant byte address 0x4 - core index']
  #allocation1 [shape = 'u32[72,128]{1,0:T(1,128)}', space=vmem, size = 0x9000, scoped, tag = 'internal scratch']
  %s0 = inlined_call_operand.hbm [shape: f32[16,4,128], index: 0, kind: input, shape index: {}]
  %s1 = inlined_call_operand.vmem [shape: f32[4,36], index: 1, kind: input, shape index: {}]
  %s2 = inlined_call_operand.vmem [shape: f32[4,1], index: 2, kind: input, shape index: {}]
  %s3 = inlined_call_operand.hbm [shape: f32[16,4,128], index: 3, kind: output, shape index: {}]
  %s4 = sld [smem:[#allocation0]]
  $region49: #{tpu_custom_call.1} parent=0
    _
  %s6 = ssub.s32 1, %s4
  %s7 = scalar_select 0, %s6, %s4
  $region1: #{tpu_custom_call.1} parent=0
    #allocation2 [shape = 'u8[32768]{0}', space=vmem, size = 0x8000, scoped, tag = 'input window, operand 0']
    #allocation3 [shape = 's32[2]{0}', space=sflag, size = 0x8, scoped, tag = 'scoped memory for tpu_custom_call.1']
    #allocation4 [shape = 's32[2]{0}', space=sflag, size = 0x8, scoped, tag = 'scoped memory for tpu_custom_call.1']
    #allocation5 [shape = 'u8[32768]{0}', space=vmem, size = 0x8000, scoped, tag = 'output window, operand 0']
    %8 = vsyncpa [#allocation3], 0
    %s9 = scalar_lea.sflag [#allocation3], 1
    %10 = vsyncpa %s9, 0
    %11 = vsyncpa [#allocation4], 0
    %s12 = scalar_lea.sflag [#allocation4], 1
    %13 = vsyncpa %s12, 0
    loop: start=0, step=1, limit=4
    $region2: #{tpu_custom_call.1} parent=1 // loop_pre_header
      _
    $region3: #{tpu_custom_call.1} parent=1 // loop_header
      %s15 = sphi 0, %s19
      %p16 = scmp.ge.s32.totalorder %s15, 4
      %s25 = sphi 0, %s27
      %s28 = sphi 0, %s25
      %s29 = sphi 0, %s28
      %s45 = sphi 0, %s29
      %s49 = sphi 0, %s49
      %s51 = sphi 0, %s49
      %s52 = sphi 0, %s51
      %s66 = sphi 0, %s52
      %s70 = sphi 0, %s70
      %s72 = sphi 0, %s70
      %s73 = sphi 0, %s72
      %s87 = sphi 0, %s73
      %s93 = sphi 0, %s95
      %s96 = sphi 0, %s93
      %s97 = sphi 0, %s96
      %s113 = sphi 0, %s97
    $region4: #{tpu_custom_call.1} parent=1 // loop_header_branch
      %18 = sbr.rel (%p16) target = $region8
    $region5: #{tpu_custom_call.1} parent=1 // loop_body
      %s20 = ssub.s32 %s15, 1
      %s21 = ssub.s32 %s15, 2
      %s22 = sadd.s32 %s15, 1
      %s23 = ssub.s32 %s15, %s22
      %p24 = scmp.eq.s32.totalorder %s23, 0
      %s26 = sadd.s32 %s25, 1
      %s27 = scalar_select %p24, %s25, %s26
      %p30 = pneg %p24
      %p31 = scmp.eq.s32.totalorder %s15, 1
      %p32 = por %p30, %p31
      %p33 = scmp.ne.s32.totalorder %s25, %s28
      %p34 = scmp.eq.s32.totalorder %s15, 0
      %p35 = por %p33, %p34
      %p36 = scmp.ne.s32.totalorder %s25, %s28
      %p37 = scmp.eq.s32.totalorder %s20, 1
      %p38 = por %p36, %p37
      %p39 = scmp.ne.s32.totalorder %s28, %s29
      %p40 = scmp.eq.s32.totalorder %s20, 0
      %p41 = por %p39, %p40
      %p42 = scmp.ne.s32.totalorder %s28, %s29
      %p43 = scmp.eq.s32.totalorder %s21, 1
      %p44 = por %p42, %p43
      %p46 = scmp.ne.s32.totalorder %s29, %s45
      %p47 = scmp.eq.s32.totalorder %s21, 0
      %p48 = por %p46, %p47
      %s50 = sadd.s32 %s49, 1
      %p53 = scmp.eq.s32.totalorder %s15, 1
      %p54 = scmp.ne.s32.totalorder %s49, %s51
      %p55 = scmp.eq.s32.totalorder %s15, 0
      %p56 = por %p54, %p55
      %p57 = scmp.ne.s32.totalorder %s49, %s51
      %p58 = scmp.eq.s32.totalorder %s20, 1
      %p59 = por %p57, %p58
      %p60 = scmp.ne.s32.totalorder %s51, %s52
      %p61 = scmp.eq.s32.totalorder %s20, 0
      %p62 = por %p60, %p61
      %p63 = scmp.ne.s32.totalorder %s51, %s52
      %p64 = scmp.eq.s32.totalorder %s21, 1
      %p65 = por %p63, %p64
      %p67 = scmp.ne.s32.totalorder %s52, %s66
      %p68 = scmp.eq.s32.totalorder %s21, 0
      %p69 = por %p67, %p68
      %s71 = sadd.s32 %s70, 1
      %p74 = scmp.eq.s32.totalorder %s15, 1
      %p75 = scmp.ne.s32.totalorder %s70, %s72
      %p76 = scmp.eq.s32.totalorder %s15, 0
      %p77 = por %p75, %p76
      %p78 = scmp.ne.s32.totalorder %s70, %s72
      %p79 = scmp.eq.s32.totalorder %s20, 1
      %p80 = por %p78, %p79
      %p81 = scmp.ne.s32.totalorder %s72, %s73
      %p82 = scmp.eq.s32.totalorder %s20, 0
      %p83 = por %p81, %p82
      %p84 = scmp.ne.s32.totalorder %s72, %s73
      %p85 = scmp.eq.s32.totalorder %s21, 1
      %p86 = por %p84, %p85
      %p88 = scmp.ne.s32.totalorder %s73, %s87
      %p89 = scmp.eq.s32.totalorder %s21, 0
      %p90 = por %p88, %p89
      %s91 = ssub.s32 %s15, %s22
      %p92 = scmp.eq.s32.totalorder %s91, 0
      %s94 = sadd.s32 %s93, 1
      %s95 = scalar_select %p92, %s93, %s94
      %p98 = pneg %p92
      %p99 = scmp.eq.s32.totalorder %s15, 1
      %p100 = por %p98, %p99
      %p101 = scmp.ne.s32.totalorder %s93, %s96
      %p102 = scmp.eq.s32.totalorder %s15, 0
      %p103 = por %p101, %p102
      %p104 = scmp.ne.s32.totalorder %s93, %s96
      %p105 = scmp.eq.s32.totalorder %s20, 1
      %p106 = por %p104, %p105
      %p107 = scmp.ne.s32.totalorder %s96, %s97
      %p108 = scmp.eq.s32.totalorder %s20, 0
      %p109 = por %p107, %p108
      %p110 = scmp.ne.s32.totalorder %s96, %s97
      %p111 = scmp.eq.s32.totalorder %s21, 1
      %p112 = por %p110, %p111
      %p114 = scmp.ne.s32.totalorder %s97, %s113
      %p115 = scmp.eq.s32.totalorder %s21, 0
      %p116 = por %p114, %p115
      %p117 = scmp.le.s32.totalorder 1, %s15
      %p118 = scmp.lt.s32.totalorder %s15, 3
      %p119 = pnand %p117, %p118
      %p120 = pneg %p119
      // Predicated region
      $region9: #{tpu_custom_call.1} parent=5 // pred_check
        _
      $region10: #{tpu_custom_call.1} parent=5 // pred_check_branch
        %122 = sbr.rel (%p119) target = $region12
      $region11: #{tpu_custom_call.1} parent=5 // pred_region
        %s123 = ssub.s32 %s15, 1
        // Predicated region
        $region13: #{tpu_custom_call.1} parent=11 // pred_check
          %p124 = pneg %p62
        $region14: #{tpu_custom_call.1} parent=11 // pred_check_branch
          %126 = sbr.rel (%p124) target = $region16
        $region15: #{tpu_custom_call.1} parent=11 // pred_region
          _
        $region16: #{tpu_custom_call.1} parent=11 // pred_fallthru
          _
        // Predicated region
        $region17: #{tpu_custom_call.1} parent=11 // pred_check
          %p127 = pneg %p83
        $region18: #{tpu_custom_call.1} parent=11 // pred_check_branch
          %129 = sbr.rel (%p127) target = $region20
        $region19: #{tpu_custom_call.1} parent=11 // pred_region
          _
        $region20: #{tpu_custom_call.1} parent=11 // pred_fallthru
          _
      $region12: #{tpu_custom_call.1} parent=5 // pred_fallthru
        _
      %p130 = scmp.lt.s32.totalorder %s15, 2
      // Predicated region
      $region21: #{tpu_custom_call.1} parent=5 // pred_check
        %p131 = pneg %p130
      $region22: #{tpu_custom_call.1} parent=5 // pred_check_branch
        %133 = sbr.rel (%p131) target = $region24
      $region23: #{tpu_custom_call.1} parent=5 // pred_region
        // Predicated region
        $region25: #{tpu_custom_call.1} parent=23 // pred_check
          %p134 = pneg %p35
        $region26: #{tpu_custom_call.1} parent=23 // pred_check_branch
          %136 = sbr.rel (%p134) target = $region28
        $region27: #{tpu_custom_call.1} parent=23 // pred_region
          %s137 = sand.u32 %s25, 1
          %s138 = scalar_lea.sflag [#allocation3], %s137
          %s139 = sand.u32 %s25, 1
          %s140 = smul.addr %s139, 32
          %s141 = scalar_lea.vmem [#allocation2], %s140
          %s142 = smul.u32 8, %s15
          %144 = vsyncadd %s138, 0
          %s145 = smul.addr %s142, 4
          %s146 = scalar_lea.hbm %s0, %s145
          %s147 = sshll.u32 %s146, 4
          %s148 = int_to_ptr.hbm [resolvable:$true] %s147
          %s149 = sshll.u32 %s141, 4
          %s150 = int_to_ptr.vmem [resolvable:$true] %s149
          %155 = dma.hbm_to_vmem [thread:$0]  %s148, 512, %s150, %s138, 64, 64, 4
        $region28: #{tpu_custom_call.1} parent=23 // pred_fallthru
          _
      $region24: #{tpu_custom_call.1} parent=5 // pred_fallthru
        _
      %p156 = scmp.le.s32.totalorder 1, %s15
      %p157 = scmp.lt.s32.totalorder %s15, 3
      %p158 = pnand %p156, %p157
      %p159 = pneg %p158
      // Predicated region
      $region29: #{tpu_custom_call.1} parent=5 // pred_check
        _
      $region30: #{tpu_custom_call.1} parent=5 // pred_check_branch
        %161 = sbr.rel (%p158) target = $region32
      $region31: #{tpu_custom_call.1} parent=5 // pred_region
        %s162 = ssub.s32 %s15, 1
        %s163 = sand.u32 %s28, 1
        %s164 = scalar_lea.sflag [#allocation3], %s163
        %s165 = sand.u32 %s28, 1
        %s166 = smul.addr %s165, 32
        %s167 = scalar_lea.vmem [#allocation2], %s166
        // Predicated region
        $region33: #{tpu_custom_call.1} parent=31 // pred_check
          %p168 = pneg %p41
        $region34: #{tpu_custom_call.1} parent=31 // pred_check_branch
          %170 = sbr.rel (%p168) target = $region36
        $region35: #{tpu_custom_call.1} parent=31 // pred_region
          %172 = dma.done %s164, 512
        $region36: #{tpu_custom_call.1} parent=31 // pred_fallthru
          _
        %s173 = sand.u32 %s28, 1
        %s174 = scalar_lea.sflag [#allocation3], %s173
        %s175 = sand.u32 %s28, 1
        %s176 = smul.addr %s175, 32
        %s177 = scalar_lea.vmem [#allocation2], %s176
        %p178 = pneg %p41
        %p179 = pneg %p38
        %p180 = pneg %p62
        %p181 = pneg %p59
        %p182 = pneg %p83
        %p183 = pneg %p80
        %p184 = pneg %p109
        %p185 = pneg %p106
        %s186 = sand.u32 %s96, 1
        %s187 = scalar_lea.sflag [#allocation4], %s186
        %s188 = sand.u32 %s96, 1
        %s189 = smul.addr %s188, 32
        %s190 = scalar_lea.vmem [#allocation5], %s189
        %s191 = smul.u32 8, %s20
        %s192 = smul.u32 8, %s20
        %v193 = vld [vmem:[%s167] sm:$0xf]
        %v194 = vld [vmem:[%s167 + $0x4] sm:$0xf]
        %v195 = vld [vmem:[%s167 + $0x8] sm:$0xf]
        %v196 = vld [vmem:[%s167 + $0xc] sm:$0xf]
        %v197 = vld [vmem:[%s167 + $0x10] sm:$0xf]
        %v198 = vld [vmem:[%s167 + $0x14] sm:$0xf]
        %v199 = vld [vmem:[%s167 + $0x18] sm:$0xf]
        %v200 = vld [vmem:[%s167 + $0x1c] sm:$0xf]
        %201 = vrot.lane.b32.xlu0 %v193, 4
        %v202 = vpop.permute.xlu0 %201
        %203 = vrot.lane.b32.xlu0 %v193, 3
        %v204 = vpop.permute.xlu0 %203
        %205 = vrot.lane.b32.xlu0 %v193, 2
        %v206 = vpop.permute.xlu0 %205
        %207 = vrot.lane.b32.xlu0 %v193, 1
        %v208 = vpop.permute.xlu0 %207
        %209 = vrot.lane.b32.xlu0 %v193, 127
        %v210 = vpop.permute.xlu0 %209
        %211 = vrot.lane.b32.xlu0 %v193, 126
        %v212 = vpop.permute.xlu0 %211
        %213 = vrot.lane.b32.xlu0 %v193, 125
        %v214 = vpop.permute.xlu0 %213
        %215 = vrot.lane.b32.xlu0 %v193, 124
        %v216 = vpop.permute.xlu0 %215
        %v218 = vrot.slane %v204, 4
        %v221 = vrot.slane %v208, 4
        %v224 = vrot.slane %v210, 4
        %v227 = vrot.slane %v214, 4
        %vm229 = vcmask 1043456
        %v230 = vsel %vm229, %v202, %v218
        %v231 = vsel %vm229, %v206, %v221
        %v232 = vsel %vm229, %v193, %v224
        %v233 = vsel %vm229, %v212, %v227
        %234 = vrot.lane.b32.xlu0 %v194, 4
        %v235 = vpop.permute.xlu0 %234
        %236 = vrot.lane.b32.xlu0 %v194, 3
        %v237 = vpop.permute.xlu0 %236
        %238 = vrot.lane.b32.xlu0 %v194, 2
        %v239 = vpop.permute.xlu0 %238
        %240 = vrot.lane.b32.xlu0 %v194, 1
        %v241 = vpop.permute.xlu0 %240
        %242 = vrot.lane.b32.xlu0 %v194, 127
        %v243 = vpop.permute.xlu0 %242
        %244 = vrot.lane.b32.xlu0 %v194, 126
        %v245 = vpop.permute.xlu0 %244
        %246 = vrot.lane.b32.xlu0 %v194, 125
        %v247 = vpop.permute.xlu0 %246
        %248 = vrot.lane.b32.xlu0 %v194, 124
        %v249 = vpop.permute.xlu0 %248
        %v251 = vrot.slane %v237, 4
        %v254 = vrot.slane %v241, 4
        %v257 = vrot.slane %v243, 4
        %v260 = vrot.slane %v247, 4
        %v262 = vsel %vm229, %v235, %v251
        %v263 = vsel %vm229, %v239, %v254
        %v264 = vsel %vm229, %v194, %v257
        %v265 = vsel %vm229, %v245, %v260
        %266 = vrot.lane.b32.xlu0 %v195, 4
        %v267 = vpop.permute.xlu0 %266
        %268 = vrot.lane.b32.xlu0 %v195, 3
        %v269 = vpop.permute.xlu0 %268
        %270 = vrot.lane.b32.xlu0 %v195, 2
        %v271 = vpop.permute.xlu0 %270
        %272 = vrot.lane.b32.xlu0 %v195, 1
        %v273 = vpop.permute.xlu0 %272
        %274 = vrot.lane.b32.xlu0 %v195, 127
        %v275 = vpop.permute.xlu0 %274
        %276 = vrot.lane.b32.xlu0 %v195, 126
        %v277 = vpop.permute.xlu0 %276
        %278 = vrot.lane.b32.xlu0 %v195, 125
        %v279 = vpop.permute.xlu0 %278
        %280 = vrot.lane.b32.xlu0 %v195, 124
        %v281 = vpop.permute.xlu0 %280
        %v283 = vrot.slane %v269, 4
        %v286 = vrot.slane %v273, 4
        %v289 = vrot.slane %v275, 4
        %v292 = vrot.slane %v279, 4
        %v294 = vsel %vm229, %v267, %v283
        %v295 = vsel %vm229, %v271, %v286
        %v296 = vsel %vm229, %v195, %v289
        %v297 = vsel %vm229, %v277, %v292
        %298 = vrot.lane.b32.xlu0 %v196, 4
        %v299 = vpop.permute.xlu0 %298
        %300 = vrot.lane.b32.xlu0 %v196, 3
        %v301 = vpop.permute.xlu0 %300
        %302 = vrot.lane.b32.xlu0 %v196, 2
        %v303 = vpop.permute.xlu0 %302
        %304 = vrot.lane.b32.xlu0 %v196, 1
        %v305 = vpop.permute.xlu0 %304
        %306 = vrot.lane.b32.xlu0 %v196, 127
        %v307 = vpop.permute.xlu0 %306
        %308 = vrot.lane.b32.xlu0 %v196, 126
        %v309 = vpop.permute.xlu0 %308
        %310 = vrot.lane.b32.xlu0 %v196, 125
        %v311 = vpop.permute.xlu0 %310
        %312 = vrot.lane.b32.xlu0 %v196, 124
        %v313 = vpop.permute.xlu0 %312
        %v315 = vrot.slane %v301, 4
        %v318 = vrot.slane %v305, 4
        %v321 = vrot.slane %v307, 4
        %v324 = vrot.slane %v311, 4
        %v326 = vsel %vm229, %v299, %v315
        %v327 = vsel %vm229, %v303, %v318
        %v328 = vsel %vm229, %v196, %v321
        %v329 = vsel %vm229, %v309, %v324
        %330 = vrot.lane.b32.xlu0 %v197, 4
        %v331 = vpop.permute.xlu0 %330
        %332 = vrot.lane.b32.xlu0 %v197, 3
        %v333 = vpop.permute.xlu0 %332
        %334 = vrot.lane.b32.xlu0 %v197, 2
        %v335 = vpop.permute.xlu0 %334
        %336 = vrot.lane.b32.xlu0 %v197, 1
        %v337 = vpop.permute.xlu0 %336
        %338 = vrot.lane.b32.xlu0 %v197, 127
        %v339 = vpop.permute.xlu0 %338
        %340 = vrot.lane.b32.xlu0 %v197, 126
        %v341 = vpop.permute.xlu0 %340
        %342 = vrot.lane.b32.xlu0 %v197, 125
        %v343 = vpop.permute.xlu0 %342
        %344 = vrot.lane.b32.xlu0 %v197, 124
        %v345 = vpop.permute.xlu0 %344
        %v347 = vrot.slane %v333, 4
        %v350 = vrot.slane %v337, 4
        %v353 = vrot.slane %v339, 4
        %v356 = vrot.slane %v343, 4
        %v358 = vsel %vm229, %v331, %v347
        %v359 = vsel %vm229, %v335, %v350
        %v360 = vsel %vm229, %v197, %v353
        %v361 = vsel %vm229, %v341, %v356
        %362 = vrot.lane.b32.xlu0 %v198, 4
        %v363 = vpop.permute.xlu0 %362
        %364 = vrot.lane.b32.xlu0 %v198, 3
        %v365 = vpop.permute.xlu0 %364
        %366 = vrot.lane.b32.xlu0 %v198, 2
        %v367 = vpop.permute.xlu0 %366
        %368 = vrot.lane.b32.xlu0 %v198, 1
        %v369 = vpop.permute.xlu0 %368
        %370 = vrot.lane.b32.xlu0 %v198, 127
        %v371 = vpop.permute.xlu0 %370
        %372 = vrot.lane.b32.xlu0 %v198, 126
        %v373 = vpop.permute.xlu0 %372
        %374 = vrot.lane.b32.xlu0 %v198, 125
        %v375 = vpop.permute.xlu0 %374
        %376 = vrot.lane.b32.xlu0 %v198, 124
        %v377 = vpop.permute.xlu0 %376
        %v379 = vrot.slane %v365, 4
        %v382 = vrot.slane %v369, 4
        %v385 = vrot.slane %v371, 4
        %v388 = vrot.slane %v375, 4
        %v390 = vsel %vm229, %v363, %v379
        %v391 = vsel %vm229, %v367, %v382
        %v392 = vsel %vm229, %v198, %v385
        %v393 = vsel %vm229, %v373, %v388
        %394 = vrot.lane.b32.xlu0 %v199, 4
        %v395 = vpop.permute.xlu0 %394
        %396 = vrot.lane.b32.xlu0 %v199, 3
        %v397 = vpop.permute.xlu0 %396
        %398 = vrot.lane.b32.xlu0 %v199, 2
        %v399 = vpop.permute.xlu0 %398
        %400 = vrot.lane.b32.xlu0 %v199, 1
        %v401 = vpop.permute.xlu0 %400
        %402 = vrot.lane.b32.xlu0 %v199, 127
        %v403 = vpop.permute.xlu0 %402
        %404 = vrot.lane.b32.xlu0 %v199, 126
        %v405 = vpop.permute.xlu0 %404
        %406 = vrot.lane.b32.xlu0 %v199, 125
        %v407 = vpop.permute.xlu0 %406
        %408 = vrot.lane.b32.xlu0 %v199, 124
        %v409 = vpop.permute.xlu0 %408
        %v411 = vrot.slane %v397, 4
        %v414 = vrot.slane %v401, 4
        %v417 = vrot.slane %v403, 4
        %v420 = vrot.slane %v407, 4
        %v422 = vsel %vm229, %v395, %v411
        %v423 = vsel %vm229, %v399, %v414
        %v424 = vsel %vm229, %v199, %v417
        %v425 = vsel %vm229, %v405, %v420
        %426 = vrot.lane.b32.xlu0 %v200, 4
        %v427 = vpop.permute.xlu0 %426
        %428 = vrot.lane.b32.xlu0 %v200, 3
        %v429 = vpop.permute.xlu0 %428
        %430 = vrot.lane.b32.xlu0 %v200, 2
        %v431 = vpop.permute.xlu0 %430
        %432 = vrot.lane.b32.xlu0 %v200, 1
        %v433 = vpop.permute.xlu0 %432
        %434 = vrot.lane.b32.xlu0 %v200, 127
        %v435 = vpop.permute.xlu0 %434
        %436 = vrot.lane.b32.xlu0 %v200, 126
        %v437 = vpop.permute.xlu0 %436
        %438 = vrot.lane.b32.xlu0 %v200, 125
        %v439 = vpop.permute.xlu0 %438
        %440 = vrot.lane.b32.xlu0 %v200, 124
        %v441 = vpop.permute.xlu0 %440
        %v443 = vrot.slane %v429, 4
        %v446 = vrot.slane %v433, 4
        %v449 = vrot.slane %v435, 4
        %v452 = vrot.slane %v439, 4
        %v454 = vsel %vm229, %v427, %v443
        %v455 = vsel %vm229, %v431, %v446
        %v456 = vsel %vm229, %v200, %v449
        %v457 = vsel %vm229, %v437, %v452
        %v458 = vld [vmem:[%s1] sm:$0xf]
        %v459 = vld [vmem:[%s2] sm:$0xf]
        %461 = vset.pattern.permute.xlu0 0
        %462 = vperm.xlu0 %461, %v459
        %v463 = vpop.permute.xlu0 %462
        %vm465 = vcmask 293888
        %v467 = vsel %vm465, %v458, 0
        %v470 = vsel %vm229, %v216, 0
        %v473 = vsel %vm229, %v249, 0
        %v476 = vsel %vm229, %v281, 0
        %v479 = vsel %vm229, %v313, 0
        %v482 = vsel %vm229, %v345, 0
        %v485 = vsel %vm229, %v377, 0
        %v488 = vsel %vm229, %v409, 0
        %v491 = vsel %vm229, %v441, 0
        %493 = vmatpush.msra.mxu0 0.0
        %494 = vmatpush.msra.mxu0 0.0
        %495 = vmatpush.msra.mxu0 0.0
        %496 = vmatpush.msra.mxu0 0.0
        %497 = vmatpush.msra.mxu0 0.0
        %498 = vmatpush.msra.mxu0 0.0
        %499 = vmatpush.msra.mxu0 0.0
        %500 = vmatpush.msra.mxu0 0.0
        %501 = vmatpush.msra.mxu0 0.0
        %502 = vmatpush.msra.mxu0 0.0
        %503 = vmatpush.msra.mxu0 0.0
        %504 = vmatpush.msra.mxu0 %v470
        %505 = vmatpush.msra.mxu0 %v233
        %506 = vmatpush.msra.mxu0 %v232
        %507 = vmatpush.msra.mxu0 %v231
        %508 = vmatpush.msra.mxu0 %v230
        %509 = vmatmul.f32.gmra.mxu0 %v467
        %v510 = vpop.f32.mrf.mxu0
        %v511 = vadd.f32 %v463, %v510
        %512 = vdwg.mxu0
        %513 = vmatpush.msra.mxu0 0.0
        %514 = vmatpush.msra.mxu0 0.0
        %515 = vmatpush.msra.mxu0 0.0
        %516 = vmatpush.msra.mxu0 0.0
        %517 = vmatpush.msra.mxu0 0.0
        %518 = vmatpush.msra.mxu0 0.0
        %519 = vmatpush.msra.mxu0 0.0
        %520 = vmatpush.msra.mxu0 0.0
        %521 = vmatpush.msra.mxu0 0.0
        %522 = vmatpush.msra.mxu0 0.0
        %523 = vmatpush.msra.mxu0 0.0
        %524 = vmatpush.msra.mxu0 %v473
        %525 = vmatpush.msra.mxu0 %v265
        %526 = vmatpush.msra.mxu0 %v264
        %527 = vmatpush.msra.mxu0 %v263
        %528 = vmatpush.msra.mxu0 %v262
        %529 = vmatmul.f32.gmra.mxu0 %v467
        %v530 = vpop.f32.mrf.mxu0
        %v531 = vadd.f32 %v463, %v530
        %532 = vdwg.mxu0
        %533 = vmatpush.msra.mxu0 0.0
        %534 = vmatpush.msra.mxu0 0.0
        %535 = vmatpush.msra.mxu0 0.0
        %536 = vmatpush.msra.mxu0 0.0
        %537 = vmatpush.msra.mxu0 0.0
        %538 = vmatpush.msra.mxu0 0.0
        %539 = vmatpush.msra.mxu0 0.0
        %540 = vmatpush.msra.mxu0 0.0
        %541 = vmatpush.msra.mxu0 0.0
        %542 = vmatpush.msra.mxu0 0.0
        %543 = vmatpush.msra.mxu0 0.0
        %544 = vmatpush.msra.mxu0 %v476
        %545 = vmatpush.msra.mxu0 %v297
        %546 = vmatpush.msra.mxu0 %v296
        %547 = vmatpush.msra.mxu0 %v295
        %548 = vmatpush.msra.mxu0 %v294
        %549 = vmatmul.f32.gmra.mxu0 %v467
        %v550 = vpop.f32.mrf.mxu0
        %v551 = vadd.f32 %v463, %v550
        %552 = vdwg.mxu0
        %553 = vmatpush.msra.mxu0 0.0
        %554 = vmatpush.msra.mxu0 0.0
        %555 = vmatpush.msra.mxu0 0.0
        %556 = vmatpush.msra.mxu0 0.0
        %557 = vmatpush.msra.mxu0 0.0
        %558 = vmatpush.msra.mxu0 0.0
        %559 = vmatpush.msra.mxu0 0.0
        %560 = vmatpush.msra.mxu0 0.0
        %561 = vmatpush.msra.mxu0 0.0
        %562 = vmatpush.msra.mxu0 0.0
        %563 = vmatpush.msra.mxu0 0.0
        %564 = vmatpush.msra.mxu0 %v479
        %565 = vmatpush.msra.mxu0 %v329
        %566 = vmatpush.msra.mxu0 %v328
        %567 = vmatpush.msra.mxu0 %v327
        %568 = vmatpush.msra.mxu0 %v326
        %569 = vmatmul.f32.gmra.mxu0 %v467
        %v570 = vpop.f32.mrf.mxu0
        %v571 = vadd.f32 %v463, %v570
        %572 = vdwg.mxu0
        %573 = vmatpush.msra.mxu0 0.0
        %574 = vmatpush.msra.mxu0 0.0
        %575 = vmatpush.msra.mxu0 0.0
        %576 = vmatpush.msra.mxu0 0.0
        %577 = vmatpush.msra.mxu0 0.0
        %578 = vmatpush.msra.mxu0 0.0
        %579 = vmatpush.msra.mxu0 0.0
        %580 = vmatpush.msra.mxu0 0.0
        %581 = vmatpush.msra.mxu0 0.0
        %582 = vmatpush.msra.mxu0 0.0
        %583 = vmatpush.msra.mxu0 0.0
        %584 = vmatpush.msra.mxu0 %v482
        %585 = vmatpush.msra.mxu0 %v361
        %586 = vmatpush.msra.mxu0 %v360
        %587 = vmatpush.msra.mxu0 %v359
        %588 = vmatpush.msra.mxu0 %v358
        %589 = vmatmul.f32.gmra.mxu0 %v467
        %v590 = vpop.f32.mrf.mxu0
        %v591 = vadd.f32 %v463, %v590
        %592 = vdwg.mxu0
        %593 = vmatpush.msra.mxu0 0.0
        %594 = vmatpush.msra.mxu0 0.0
        %595 = vmatpush.msra.mxu0 0.0
        %596 = vmatpush.msra.mxu0 0.0
        %597 = vmatpush.msra.mxu0 0.0
        %598 = vmatpush.msra.mxu0 0.0
        %599 = vmatpush.msra.mxu0 0.0
        %600 = vmatpush.msra.mxu0 0.0
        %601 = vmatpush.msra.mxu0 0.0
        %602 = vmatpush.msra.mxu0 0.0
        %603 = vmatpush.msra.mxu0 0.0
        %604 = vmatpush.msra.mxu0 %v485
        %605 = vmatpush.msra.mxu0 %v393
        %606 = vmatpush.msra.mxu0 %v392
        %607 = vmatpush.msra.mxu0 %v391
        %608 = vmatpush.msra.mxu0 %v390
        %609 = vmatmul.f32.gmra.mxu0 %v467
        %v610 = vpop.f32.mrf.mxu0
        %v611 = vadd.f32 %v463, %v610
        %612 = vdwg.mxu0
        %613 = vmatpush.msra.mxu0 0.0
        %614 = vmatpush.msra.mxu0 0.0
        %615 = vmatpush.msra.mxu0 0.0
        %616 = vmatpush.msra.mxu0 0.0
        %617 = vmatpush.msra.mxu0 0.0
        %618 = vmatpush.msra.mxu0 0.0
        %619 = vmatpush.msra.mxu0 0.0
        %620 = vmatpush.msra.mxu0 0.0
        %621 = vmatpush.msra.mxu0 0.0
        %622 = vmatpush.msra.mxu0 0.0
        %623 = vmatpush.msra.mxu0 0.0
        %624 = vmatpush.msra.mxu0 %v488
        %625 = vmatpush.msra.mxu0 %v425
        %626 = vmatpush.msra.mxu0 %v424
        %627 = vmatpush.msra.mxu0 %v423
        %628 = vmatpush.msra.mxu0 %v422
        %629 = vmatmul.f32.gmra.mxu0 %v467
        %v630 = vpop.f32.mrf.mxu0
        %v631 = vadd.f32 %v463, %v630
        %632 = vdwg.mxu0
        %633 = vmatpush.msra.mxu0 0.0
        %634 = vmatpush.msra.mxu0 0.0
        %635 = vmatpush.msra.mxu0 0.0
        %636 = vmatpush.msra.mxu0 0.0
        %637 = vmatpush.msra.mxu0 0.0
        %638 = vmatpush.msra.mxu0 0.0
        %639 = vmatpush.msra.mxu0 0.0
        %640 = vmatpush.msra.mxu0 0.0
        %641 = vmatpush.msra.mxu0 0.0
        %642 = vmatpush.msra.mxu0 0.0
        %643 = vmatpush.msra.mxu0 0.0
        %644 = vmatpush.msra.mxu0 %v491
        %645 = vmatpush.msra.mxu0 %v457
        %646 = vmatpush.msra.mxu0 %v456
        %647 = vmatpush.msra.mxu0 %v455
        %648 = vmatpush.msra.mxu0 %v454
        %649 = vmatmul.f32.gmra.mxu0 %v467
        %v650 = vpop.f32.mrf.mxu0
        %v651 = vadd.f32 %v463, %v650
        %652 = vdwg.mxu0
        %653 = vst [vmem:[%s190] sm:$0xf] %v511
        %s654 = scalar_lea.vmem %s190, 4 [#allocation5]
        %655 = vst [vmem:[%s654] sm:$0xf] %v531
        %s656 = scalar_lea.vmem %s190, 8 [#allocation5]
        %657 = vst [vmem:[%s656] sm:$0xf] %v551
        %s658 = scalar_lea.vmem %s190, 12 [#allocation5]
        %659 = vst [vmem:[%s658] sm:$0xf] %v571
        %s660 = scalar_lea.vmem %s190, 16 [#allocation5]
        %661 = vst [vmem:[%s660] sm:$0xf] %v591
        %s662 = scalar_lea.vmem %s190, 20 [#allocation5]
        %663 = vst [vmem:[%s662] sm:$0xf] %v611
        %s664 = scalar_lea.vmem %s190, 24 [#allocation5]
        %665 = vst [vmem:[%s664] sm:$0xf] %v631
        %s666 = scalar_lea.vmem %s190, 28 [#allocation5]
        %667 = vst [vmem:[%s666] sm:$0xf] %v651
        %s668 = sand.u32 %s96, 1
        %s669 = scalar_lea.sflag [#allocation4], %s668
        %s670 = sand.u32 %s96, 1
        %s671 = smul.addr %s670, 32
        %s672 = scalar_lea.vmem [#allocation5], %s671
        // Predicated region
        $region37: #{tpu_custom_call.1} parent=31 // pred_check
          %p673 = pneg %p106
        $region38: #{tpu_custom_call.1} parent=31 // pred_check_branch
          %675 = sbr.rel (%p673) target = $region40
        $region39: #{tpu_custom_call.1} parent=31 // pred_region
          %s676 = smul.u32 8, %s20
          %678 = vsyncadd %s669, 0
          %s679 = smul.addr %s676, 4
          %s680 = scalar_lea.hbm %s3, %s679
          %s681 = sshll.u32 %s672, 4
          %s682 = int_to_ptr.vmem [resolvable:$true] %s681
          %s683 = sshll.u32 %s680, 4
          %s684 = int_to_ptr.hbm [resolvable:$true] %s683
          %689 = dma.vmem_to_hbm [thread:$0]  %s682, 512, %s684, %s669, 64, 64, 4
        $region40: #{tpu_custom_call.1} parent=31 // pred_fallthru
          _
      $region32: #{tpu_custom_call.1} parent=5 // pred_fallthru
        _
      %p690 = scmp.le.s32.totalorder 2, %s15
      // Predicated region
      $region41: #{tpu_custom_call.1} parent=5 // pred_check
        %p691 = pneg %p690
      $region42: #{tpu_custom_call.1} parent=5 // pred_check_branch
        %693 = sbr.rel (%p691) target = $region44
      $region43: #{tpu_custom_call.1} parent=5 // pred_region
        %s694 = ssub.s32 %s15, 2
        // Predicated region
        $region45: #{tpu_custom_call.1} parent=43 // pred_check
          %p695 = pneg %p112
        $region46: #{tpu_custom_call.1} parent=43 // pred_check_branch
          %697 = sbr.rel (%p695) target = $region48
        $region47: #{tpu_custom_call.1} parent=43 // pred_region
          %s698 = sand.u32 %s97, 1
          %s699 = scalar_lea.sflag [#allocation4], %s698
          %s700 = sand.u32 %s97, 1
          %s701 = smul.addr %s700, 32
          %s702 = scalar_lea.vmem [#allocation5], %s701
          %704 = dma.done %s699, 512
        $region48: #{tpu_custom_call.1} parent=43 // pred_fallthru
          _
      $region44: #{tpu_custom_call.1} parent=5 // pred_fallthru
        _
    $region6: #{tpu_custom_call.1} parent=1 // loop_footer
      %s19 = sadd.s32 1, %s15
    $region7: #{tpu_custom_call.1} parent=1 // loop_footer_branch
      %14 = sbr.rel target = $region3
    $region8: #{tpu_custom_call.1} parent=1 // loop_exit
      _
    %705 = vsyncpa [#allocation3], 1
    %s706 = scalar_lea.sflag [#allocation3], 1
    %707 = vsyncpa %s706, 1
    %708 = vsyncpa [#allocation4], 1
    %s709 = scalar_lea.sflag [#allocation4], 1
    %710 = vsyncpa %s709, 1

</llo_original>
